<compile_context>
chip_gen: v7x
topology: tpu7x:2x2x1
jax: 0.10.0
libtpu: 0.0.40
codegen_flags: <defaults>
</compile_context>

<pallas_src>
import jax
import jax.numpy as jnp
from jax.experimental import pallas as pl
from jax.experimental.pallas import tpu as pltpu

EPS = 1e-5  # torch.nn.LayerNorm default

VMEM_SOFT_BUDGET = 40 * 1024 * 1024  # decision budget (safe on v5e/v6e/v7x)
VMEM_LIMIT_CAP = 56 * 1024 * 1024    # stay under v7x's 64 MiB per-TC VMEM


def _layernorm_f32(x_f32, gamma_f32, beta_f32):
    mean = jnp.mean(x_f32, axis=-1, keepdims=True)
    xc = x_f32 - mean
    var = jnp.mean(xc * xc, axis=-1, keepdims=True)
    inv = jax.lax.rsqrt(var + EPS)
    return (xc * inv) * gamma_f32 + beta_f32


# ---------------------------------------------------------------------------
# Kernel A: weights resident in VMEM (grid over row tiles only).
# ---------------------------------------------------------------------------
def ffn_kernel_resident(x_ref, gamma_ref, beta_ref, w1_ref, b1_ref, w2_ref,
                        b2_ref, o_ref):
    xn = _layernorm_f32(x_ref[...].astype(jnp.float32),
                        gamma_ref[...].astype(jnp.float32),
                        beta_ref[...].astype(jnp.float32))
    # Linear(dim -> 4*dim): bf16 MXU, f32 accumulation.
    h = jnp.dot(xn.astype(w1_ref.dtype), w1_ref[...],
                preferred_element_type=jnp.float32)
    h = h + b1_ref[...].astype(jnp.float32)
    # SiLU (f32, sigmoid on EUP). Dropout(p=0) is the identity.
    h = h * jax.nn.sigmoid(h)
    # Linear(4*dim -> dim)
    y = jnp.dot(h.astype(w2_ref.dtype), w2_ref[...],
                preferred_element_type=jnp.float32)
    y = y + b2_ref[...].astype(jnp.float32)
    o_ref[...] = y.astype(o_ref.dtype)


# ---------------------------------------------------------------------------
# Kernel B: hidden dimension tiled (grid = (n_rows, n_h)), f32 accumulator.
# ---------------------------------------------------------------------------
def ffn_kernel_tiled(x_ref, gamma_ref, beta_ref, w1_ref, b1_ref, w2_ref,
                     b2_ref, o_ref, xn_ref, acc_ref):
    j = pl.program_id(1)  # hidden (H) tile index

    # New row tile: LayerNorm once (f32 stats), stash bf16 activations, reset acc.
    @pl.when(j == 0)
    def _():
        xn = _layernorm_f32(x_ref[...].astype(jnp.float32),
                            gamma_ref[...].astype(jnp.float32),
                            beta_ref[...].astype(jnp.float32))
        xn_ref[...] = xn.astype(xn_ref.dtype)
        acc_ref[...] = jnp.zeros_like(acc_ref)

    h = jnp.dot(xn_ref[...], w1_ref[...],
                preferred_element_type=jnp.float32)
    h = h + b1_ref[...].astype(jnp.float32)
    h = h * jax.nn.sigmoid(h)  # SiLU; Dropout(p=0) is the identity.

    acc_ref[...] += jnp.dot(h.astype(w2_ref.dtype), w2_ref[...],
                            preferred_element_type=jnp.float32)

    @pl.when(j == pl.num_programs(1) - 1)
    def _():
        y = acc_ref[...] + b2_ref[...].astype(jnp.float32)
        o_ref[...] = y.astype(o_ref.dtype)


# ---------------------------------------------------------------------------
# Tile selection helpers
# ---------------------------------------------------------------------------
def _round_up(x, m):
    return ((x + m - 1) // m) * m


def _pick_divisor_tile(total, target, granule):
    """Largest multiple of `granule` <= target that evenly divides `total`."""
    t = (min(target, total) // granule) * granule
    while t >= granule:
        if total % t == 0:
            return t
        t -= granule
    return None


def _select_row_tile(rows, target):
    """Return (row_tile, padded_rows); prefer exact divisors (no pad/slice)."""
    if rows <= target:
        return rows, rows  # one full-extent tile, no padding
    t = _pick_divisor_tile(rows, target, 8)
    if t is not None and t >= max(64, target // 4):
        return t, rows  # exact divisor -> no jnp.pad / output slice copies
    tm = _round_up(min(target, rows), 8)
    return tm, _round_up(rows, tm)


# ---------------------------------------------------------------------------
# Wrapper
# ---------------------------------------------------------------------------
def prepare_ffn_params(gamma, beta, w1, b1, w2, b2, compute_dtype=jnp.bfloat16):
    """Cast matmul weights to the MXU compute dtype ONCE, outside the per-call
    hot path (avoids an HBM-sized cast before every forward)."""
    return (gamma.astype(jnp.float32), beta.astype(jnp.float32),
            w1.astype(compute_dtype), b1.astype(jnp.float32),
            w2.astype(compute_dtype), b2.astype(jnp.float32))


def ffn_block(x, gamma, beta, w1, b1, w2, b2, *, tm=None, th=None,
              compute_dtype=jnp.bfloat16, weights_resident=None):
    """x: (B, S, D) -> (B, S, D). Weights: w1 (D, 4D), w2 (4D, D)."""
    B, S, D = x.shape
    H = w1.shape[1]
    rows = B * S

    gamma = gamma.reshape(1, D)
    beta = beta.reshape(1, D)
    b1 = b1.reshape(1, H)
    b2 = b2.reshape(1, D)

    # Weights should already be in compute_dtype (prepare_ffn_params);
    # cast here only as a fallback.
    if w1.dtype != compute_dtype:
        w1 = w1.astype(compute_dtype)
    if w2.dtype != compute_dtype:
        w2 = w2.astype(compute_dtype)

    xbytes = jnp.dtype(x.dtype).itemsize
    wbytes = jnp.dtype(compute_dtype).itemsize
    f32 = 4

    tm_target = 512 if tm is None else tm
    tm_, rows_p = _select_row_tile(rows, tm_target)
    n_rows = rows_p // tm_

    # VMEM footprint estimate for the weights-resident path (2-buffered x/out
    # tiles, weights budgeted at 2 copies to be safe, f32/bf16 temporaries for
    # the (tm, H) hidden activation, LayerNorm temporaries).
    weight_bytes = 2 * D * H * wbytes
    resident_est = (2 * tm_ * D * 2 * xbytes       # x + out tiles, double-buffered
                    + 2 * weight_bytes
                    + tm_ * H * (f32 + wbytes)     # hidden activation temporaries
                    + 4 * tm_ * D * f32)           # LN / output temporaries
    if weights_resident is None:
        weights_resident = resident_est <= VMEM_SOFT_BUDGET

    x2d = x.reshape(rows, D)
    if rows_p != rows:
        x2d = jnp.pad(x2d, ((0, rows_p - rows), (0, 0)))

    if weights_resident:
        vmem_limit = int(min(max(int(resident_est * 1.2), 32 * 1024 * 1024),
                             VMEM_LIMIT_CAP))
        out2d = pl.pallas_call(
            ffn_kernel_resident,
            out_shape=jax.ShapeDtypeStruct((rows_p, D), x.dtype),
            grid_spec=pltpu.PrefetchScalarGridSpec(
                num_scalar_prefetch=0,
                grid=(n_rows,),
                in_specs=[
                    pl.BlockSpec((tm_, D), lambda i: (i, 0)),  # x row tile
                    pl.BlockSpec((1, D), lambda i: (0, 0)),    # gamma
                    pl.BlockSpec((1, D), lambda i: (0, 0)),    # beta
                    pl.BlockSpec((D, H), lambda i: (0, 0)),    # w1 (resident)
                    pl.BlockSpec((1, H), lambda i: (0, 0)),    # b1
                    pl.BlockSpec((H, D), lambda i: (0, 0)),    # w2 (resident)
                    pl.BlockSpec((1, D), lambda i: (0, 0)),    # b2
                ],
                out_specs=pl.BlockSpec((tm_, D), lambda i: (i, 0)),
            ),
            compiler_params=pltpu.CompilerParams(
                dimension_semantics=("parallel",),
                vmem_limit_bytes=vmem_limit),
        )(x2d, gamma, beta, w1, b1, w2, b2)
    else:
        # ----- H-tiled fallback path (large D) -----
        th_target = 512 if th is None else th
        Hp = _round_up(H, 128)
        if Hp != H:  # zero-padded hidden units contribute exactly 0
            w1 = jnp.pad(w1, ((0, 0), (0, Hp - H)))
            b1 = jnp.pad(b1, ((0, 0), (0, Hp - H)))
            w2 = jnp.pad(w2, ((0, Hp - H), (0, 0)))
        th_ = None
        if Hp % 256 == 0:  # prefer MXU-width (v6e/v7x) granule
            th_ = _pick_divisor_tile(Hp, th_target, 256)
        if th_ is None:
            th_ = _pick_divisor_tile(Hp, th_target, 128)
        if th_ is None:
            th_ = Hp
        n_h = Hp // th_

        tiled_est = (2 * tm_ * D * 2 * xbytes          # x + out tiles, 2-buffered
                     + 2 * (2 * D * th_ * wbytes)      # w1/w2 tiles, 2-buffered
                     + tm_ * D * (wbytes + f32)        # xn scratch + f32 acc
                     + tm_ * th_ * (f32 + wbytes)      # hidden tile temporaries
                     + 4 * tm_ * D * f32)
        vmem_limit = int(min(max(int(tiled_est * 1.2), 32 * 1024 * 1024),
                             VMEM_LIMIT_CAP))

        out2d = pl.pallas_call(
            ffn_kernel_tiled,
            out_shape=jax.ShapeDtypeStruct((rows_p, D), x.dtype),
            grid_spec=pltpu.PrefetchScalarGridSpec(
                num_scalar_prefetch=0,
                grid=(n_rows, n_h),
                in_specs=[
                    pl.BlockSpec((tm_, D), lambda i, j: (i, 0)),   # x row tile
                    pl.BlockSpec((1, D), lambda i, j: (0, 0)),     # gamma
                    pl.BlockSpec((1, D), lambda i, j: (0, 0)),     # beta
                    pl.BlockSpec((D, th_), lambda i, j: (0, j)),   # w1 H tile
                    pl.BlockSpec((1, th_), lambda i, j: (0, j)),   # b1 H tile
                    pl.BlockSpec((th_, D), lambda i, j: (j, 0)),   # w2 H tile
                    pl.BlockSpec((1, D), lambda i, j: (0, 0)),     # b2
                ],
                out_specs=pl.BlockSpec((tm_, D), lambda i, j: (i, 0)),
                scratch_shapes=[
                    pltpu.VMEM((tm_, D), compute_dtype),  # normalized activations
                    pltpu.VMEM((tm_, D), jnp.float32),    # output accumulator
                ],
            ),
            compiler_params=pltpu.CompilerParams(
                dimension_semantics=("parallel", "arbitrary"),
                vmem_limit_bytes=vmem_limit),
        )(x2d, gamma, beta, w1, b1, w2, b2)

    if rows_p != rows:
        out2d = out2d[:rows]
    return out2d.reshape(B, S, D)


# ---------------------------------------------------------------------------
# Pure-JAX reference matching the kernel's precision path.
# ---------------------------------------------------------------------------
def ffn_reference(x, gamma, beta, w1, b1, w2, b2, compute_dtype=jnp.bfloat16):
    xf = x.astype(jnp.float32)
    mean = jnp.mean(xf, axis=-1, keepdims=True)
    var = jnp.mean((xf - mean) ** 2, axis=-1, keepdims=True)
    xn = (xf - mean) * jax.lax.rsqrt(var + EPS)
    xn = xn * gamma.reshape(-1).astype(jnp.float32) + beta.reshape(-1).astype(jnp.float32)
    h = jnp.dot(xn.astype(compute_dtype), w1.astype(compute_dtype),
                preferred_element_type=jnp.float32)
    h = h + b1.reshape(-1).astype(jnp.float32)
    h = h * jax.nn.sigmoid(h)
    y = jnp.dot(h.astype(compute_dtype), w2.astype(compute_dtype),
                preferred_element_type=jnp.float32)
    y = y + b2.reshape(-1).astype(jnp.float32)
    return y.astype(x.dtype)


if __name__ == "__main__":
    def make_params(key, D, H):
        kg, kb, kw1, kb1, kw2, kb2 = jax.random.split(key, 6)
        gamma = 1.0 + 0.1 * jax.random.normal(kg, (D,), dtype=jnp.float32)
        beta = 0.1 * jax.random.normal(kb, (D,), dtype=jnp.float32)
        w1 = jax.random.normal(kw1, (D, H), dtype=jnp.float32) * (1.0 / D) ** 0.5
        b1 = 0.01 * jax.random.normal(kb1, (H,), dtype=jnp.float32)
        w2 = jax.random.normal(kw2, (H, D), dtype=jnp.float32) * (1.0 / H) ** 0.5
        b2 = 0.01 * jax.random.normal(kb2, (D,), dtype=jnp.float32)
        return gamma, beta, w1, b1, w2, b2

    def run_case(B, S, D, name, *, x_dtype=jnp.float32, tm=None, th=None,
                 weights_resident=None, tol=2e-2):
        H = 4 * D
        key = jax.random.PRNGKey(0)
        kx, kp = jax.random.split(key)
        x = jax.random.normal(kx, (B, S, D), dtype=jnp.float32).astype(x_dtype)
        raw = make_params(kp, D, H)
        # Cast weights to the MXU dtype once, outside the hot path.
        params = prepare_ffn_params(*raw)

        out = ffn_block(x, *params, tm=tm, th=th,
                        weights_resident=weights_resident)
        out = jax.block_until_ready(out)
        ref = ffn_reference(x, *params)

        assert out.shape == (B, S, D), name
        assert out.dtype == x.dtype, name
        ok = jnp.allclose(out.astype(jnp.float32), ref.astype(jnp.float32),
                          atol=tol, rtol=tol)
        assert ok, f"mismatch vs reference ({name})"

    # Case 1: module default dim=144 (not a multiple of 128), small seq.
    # Weights-resident path, single full row tile, no padding copies.
    run_case(B=2, S=8, D=144, name="resident_dim144")

    # Case 2: force the H-tiled accumulator path (grid = 2 row tiles x 4
    # hidden tiles) with bf16 activations/output.
    run_case(B=2, S=64, D=128, name="tiled_bf16", x_dtype=jnp.bfloat16,
             tm=64, th=128, weights_resident=False, tol=5e-2)

    # Case 3: ragged row count (200 rows -> padded to 256) on the resident path.
    run_case(B=4, S=50, D=144, name="resident_rowpad", tm=128)

    print("KERNEL_OK")
</pallas_src>

<mosaic_0001>
module attributes {stable_mosaic.version = 11 : i64} {
  func.func @ffn_kernel_resident(%arg0: i32, %arg1: memref<16x144xf32, #tpu.memory_space<vmem>>, %arg2: memref<1x144xf32, #tpu.memory_space<vmem>>, %arg3: memref<1x144xf32, #tpu.memory_space<vmem>>, %arg4: memref<144x576xbf16, #tpu.memory_space<vmem>>, %arg5: memref<1x576xf32, #tpu.memory_space<vmem>>, %arg6: memref<576x144xbf16, #tpu.memory_space<vmem>>, %arg7: memref<1x144xf32, #tpu.memory_space<vmem>>, %arg8: memref<16x144xf32, #tpu.memory_space<vmem>>) attributes {dimension_semantics = [#tpu.dimension_semantics<parallel>], iteration_bounds = array<i64: 1>, scalar_prefetch = 0 : i64, scratch_operands = 0 : i64, tpu.core_type = #tpu.core_type<tc>, window_params = [{transform_indices = @transform_0, window_bounds = array<i64: 16, 144>}, {pipeline_mode = #tpu.pipeline_mode<synchronous>, transform_indices = @transform_1, window_bounds = array<i64: 1, 144>}, {pipeline_mode = #tpu.pipeline_mode<synchronous>, transform_indices = @transform_2, window_bounds = array<i64: 1, 144>}, {pipeline_mode = #tpu.pipeline_mode<synchronous>, transform_indices = @transform_3, window_bounds = array<i64: 144, 576>}, {pipeline_mode = #tpu.pipeline_mode<synchronous>, transform_indices = @transform_4, window_bounds = array<i64: 1, 576>}, {pipeline_mode = #tpu.pipeline_mode<synchronous>, transform_indices = @transform_5, window_bounds = array<i64: 576, 144>}, {pipeline_mode = #tpu.pipeline_mode<synchronous>, transform_indices = @transform_6, window_bounds = array<i64: 1, 144>}, {transform_indices = @transform_7, window_bounds = array<i64: 16, 144>}]} {
    %c0 = arith.constant 0 : index
    %c0_0 = arith.constant 0 : index
    %0 = vector.load %arg1[%c0, %c0_0] : memref<16x144xf32, #tpu.memory_space<vmem>>, vector<16x144xf32>
    %c0_1 = arith.constant 0 : index
    %c0_2 = arith.constant 0 : index
    %1 = vector.load %arg2[%c0_1, %c0_2] : memref<1x144xf32, #tpu.memory_space<vmem>>, vector<1x144xf32>
    %c0_3 = arith.constant 0 : index
    %c0_4 = arith.constant 0 : index
    %2 = vector.load %arg3[%c0_3, %c0_4] : memref<1x144xf32, #tpu.memory_space<vmem>>, vector<1x144xf32>
    %cst = arith.constant dense<0.000000e+00> : vector<16xf32>
    %3 = vector.multi_reduction <add>, %0, %cst [1] : vector<16x144xf32> to vector<16xf32>
    %4 = vector.shape_cast %3 : vector<16xf32> to vector<16x1xf32>
    %cst_5 = arith.constant 1.440000e+02 : f32
    %5 = vector.broadcast %cst_5 : f32 to vector<16x1xf32>
    %6 = arith.divf %4, %5 : vector<16x1xf32>
    %7 = vector.broadcast %6 : vector<16x1xf32> to vector<16x144xf32>
    %8 = arith.subf %0, %7 : vector<16x144xf32>
    %9 = arith.mulf %8, %8 : vector<16x144xf32>
    %cst_6 = arith.constant dense<0.000000e+00> : vector<16xf32>
    %10 = vector.multi_reduction <add>, %9, %cst_6 [1] : vector<16x144xf32> to vector<16xf32>
    %11 = vector.shape_cast %10 : vector<16xf32> to vector<16x1xf32>
    %cst_7 = arith.constant 1.440000e+02 : f32
    %12 = vector.broadcast %cst_7 : f32 to vector<16x1xf32>
    %13 = arith.divf %11, %12 : vector<16x1xf32>
    %cst_8 = arith.constant 9.99999974E-6 : f32
    %14 = vector.broadcast %cst_8 : f32 to vector<16x1xf32>
    %15 = arith.addf %13, %14 : vector<16x1xf32>
    %16 = math.rsqrt %15 : vector<16x1xf32>
    %17 = vector.broadcast %16 : vector<16x1xf32> to vector<16x144xf32>
    %18 = arith.mulf %8, %17 : vector<16x144xf32>
    %19 = vector.broadcast %1 : vector<1x144xf32> to vector<16x144xf32>
    %20 = arith.mulf %18, %19 : vector<16x144xf32>
    %21 = vector.broadcast %2 : vector<1x144xf32> to vector<16x144xf32>
    %22 = arith.addf %20, %21 : vector<16x144xf32>
    %23 = arith.truncf %22 : vector<16x144xf32> to vector<16x144xbf16>
    %c0_9 = arith.constant 0 : index
    %c0_10 = arith.constant 0 : index
    %24 = vector.load %arg4[%c0_9, %c0_10] : memref<144x576xbf16, #tpu.memory_space<vmem>>, vector<144x576xbf16>
    %cst_11 = arith.constant dense<0.000000e+00> : vector<16x576xf32>
    %25 = tpu.matmul %23, %24, %cst_11 {dimension_numbers = #tpu.dot_dimension_numbers<[1], [0], [0], [1], [0, 0, 1, 1], [], []>} : vector<16x144xbf16>, vector<144x576xbf16>, vector<16x576xf32> -> vector<16x576xf32>
    %c0_12 = arith.constant 0 : index
    %c0_13 = arith.constant 0 : index
    %26 = vector.load %arg5[%c0_12, %c0_13] : memref<1x576xf32, #tpu.memory_space<vmem>>, vector<1x576xf32>
    %27 = vector.broadcast %26 : vector<1x576xf32> to vector<16x576xf32>
    %28 = arith.addf %25, %27 : vector<16x576xf32>
    %29 = arith.negf %28 : vector<16x576xf32>
    %30 = math.exp %29 : vector<16x576xf32>
    %cst_14 = arith.constant 1.000000e+00 : f32
    %31 = vector.broadcast %cst_14 : f32 to vector<16x576xf32>
    %32 = arith.addf %31, %30 : vector<16x576xf32>
    %33 = arith.divf %31, %32 : vector<16x576xf32>
    %34 = arith.mulf %28, %33 : vector<16x576xf32>
    %35 = arith.truncf %34 : vector<16x576xf32> to vector<16x576xbf16>
    %c0_15 = arith.constant 0 : index
    %c0_16 = arith.constant 0 : index
    %36 = vector.load %arg6[%c0_15, %c0_16] : memref<576x144xbf16, #tpu.memory_space<vmem>>, vector<576x144xbf16>
    %cst_17 = arith.constant dense<0.000000e+00> : vector<16x144xf32>
    %37 = tpu.matmul %35, %36, %cst_17 {dimension_numbers = #tpu.dot_dimension_numbers<[1], [0], [0], [1], [0, 0, 1, 1], [], []>} : vector<16x576xbf16>, vector<576x144xbf16>, vector<16x144xf32> -> vector<16x144xf32>
    %c0_18 = arith.constant 0 : index
    %c0_19 = arith.constant 0 : index
    %38 = vector.load %arg7[%c0_18, %c0_19] : memref<1x144xf32, #tpu.memory_space<vmem>>, vector<1x144xf32>
    %39 = vector.broadcast %38 : vector<1x144xf32> to vector<16x144xf32>
    %40 = arith.addf %37, %39 : vector<16x144xf32>
    %c0_20 = arith.constant 0 : index
    %c0_21 = arith.constant 0 : index
    %41 = vector.load %arg8[%c0_20, %c0_21] : memref<16x144xf32, #tpu.memory_space<vmem>>, vector<16x144xf32>
    tpu.vector_store %arg8[%c0_20, %c0_21], %40 {strides = array<i32>} : memref<16x144xf32, #tpu.memory_space<vmem>>, vector<16x144xf32>,
    return
  }
  func.func @transform_0(%arg0: i32) -> (i32, i32) {
    %c0_i32 = arith.constant 0 : i32
    %c0_i32_0 = arith.constant 0 : i32
    return %arg0, %c0_i32 : i32, i32
  }
  func.func @transform_1(%arg0: i32) -> (i32, i32) {
    %c0_i32 = arith.constant 0 : i32
    %c0_i32_0 = arith.constant 0 : i32
    %c0_i32_1 = arith.constant 0 : i32
    return %c0_i32, %c0_i32_0 : i32, i32
  }
  func.func @transform_2(%arg0: i32) -> (i32, i32) {
    %c0_i32 = arith.constant 0 : i32
    %c0_i32_0 = arith.constant 0 : i32
    %c0_i32_1 = arith.constant 0 : i32
    return %c0_i32, %c0_i32_0 : i32, i32
  }
  func.func @transform_3(%arg0: i32) -> (i32, i32) {
    %c0_i32 = arith.constant 0 : i32
    %c0_i32_0 = arith.constant 0 : i32
    %c0_i32_1 = arith.constant 0 : i32
    return %c0_i32, %c0_i32_0 : i32, i32
  }
  func.func @transform_4(%arg0: i32) -> (i32, i32) {
    %c0_i32 = arith.constant 0 : i32
    %c0_i32_0 = arith.constant 0 : i32
    %c0_i32_1 = arith.constant 0 : i32
    return %c0_i32, %c0_i32_0 : i32, i32
  }
  func.func @transform_5(%arg0: i32) -> (i32, i32) {
    %c0_i32 = arith.constant 0 : i32
    %c0_i32_0 = arith.constant 0 : i32
    %c0_i32_1 = arith.constant 0 : i32
    return %c0_i32, %c0_i32_0 : i32, i32
  }
  func.func @transform_6(%arg0: i32) -> (i32, i32) {
    %c0_i32 = arith.constant 0 : i32
    %c0_i32_0 = arith.constant 0 : i32
    %c0_i32_1 = arith.constant 0 : i32
    return %c0_i32, %c0_i32_0 : i32, i32
  }
  func.func @transform_7(%arg0: i32) -> (i32, i32) {
    %c0_i32 = arith.constant 0 : i32
    %c0_i32_0 = arith.constant 0 : i32
    return %arg0, %c0_i32 : i32, i32
  }
}

</mosaic_0001>

<llo_original>
// kernel: tpu_custom_call.1
$region0: #{tpu_custom_call.1}
  #allocation0 [shape = 'u32[]', space=smem, size = 0x4, offset = 0x4, fixed_abs, tag = 'smem constant byte address 0x4 - core index']
  #allocation1 [shape = 'u32[144,128]{1,0:T(1,128)}', space=vmem, size = 0x12000, scoped, tag = 'internal scratch']
  %s0 = inlined_call_operand.vmem [shape: f32[16,144], index: 0, kind: input, shape index: {}]
  %s1 = inlined_call_operand.vmem [shape: f32[1,144], index: 1, kind: input, shape index: {}]
  %s2 = inlined_call_operand.vmem [shape: f32[1,144], index: 2, kind: input, shape index: {}]
  %s3 = inlined_call_operand.vmem [shape: bf16[144,576], index: 3, kind: input, shape index: {}]
  %s4 = inlined_call_operand.vmem [shape: f32[1,576], index: 4, kind: input, shape index: {}]
  %s5 = inlined_call_operand.vmem [shape: bf16[576,144], index: 5, kind: input, shape index: {}]
  %s6 = inlined_call_operand.vmem [shape: f32[1,144], index: 6, kind: input, shape index: {}]
  %s7 = inlined_call_operand.hbm [shape: f32[16,144], index: 7, kind: output, shape index: {}]
  %s8 = sld [smem:[#allocation0]]
  $region38: #{tpu_custom_call.1} parent=0
    _
  %s10 = ssub.s32 1, %s8
  %s11 = scalar_select 0, %s10, %s8
  $region1: #{tpu_custom_call.1} parent=0
    #allocation2 [shape = 'u8[16384]{0}', space=vmem, size = 0x4000, scoped, tag = 'output window, operand 0, single buffered']
    #allocation3 [shape = 's32[1]{0}', space=sflag, size = 0x4, scoped, tag = 'scoped memory for tpu_custom_call.1']
    %12 = vsyncpa [#allocation3], 0
    // Predicated region
    $region2: #{tpu_custom_call.1} parent=1 // pred_check
      _
    $region3: #{tpu_custom_call.1} parent=1 // pred_check_branch
      %14 = sbr.rel (0) target = $region5
    $region4: #{tpu_custom_call.1} parent=1 // pred_region
      _
    $region5: #{tpu_custom_call.1} parent=1 // pred_fallthru
      _
    // Predicated region
    $region6: #{tpu_custom_call.1} parent=1 // pred_check
      _
    $region7: #{tpu_custom_call.1} parent=1 // pred_check_branch
      %16 = sbr.rel (0) target = $region9
    $region8: #{tpu_custom_call.1} parent=1 // pred_region
      _
    $region9: #{tpu_custom_call.1} parent=1 // pred_fallthru
      _
    // Predicated region
    $region10: #{tpu_custom_call.1} parent=1 // pred_check
      _
    $region11: #{tpu_custom_call.1} parent=1 // pred_check_branch
      %18 = sbr.rel (0) target = $region13
    $region12: #{tpu_custom_call.1} parent=1 // pred_region
      _
    $region13: #{tpu_custom_call.1} parent=1 // pred_fallthru
      _
    // Predicated region
    $region14: #{tpu_custom_call.1} parent=1 // pred_check
      _
    $region15: #{tpu_custom_call.1} parent=1 // pred_check_branch
      %20 = sbr.rel (0) target = $region17
    $region16: #{tpu_custom_call.1} parent=1 // pred_region
      _
    $region17: #{tpu_custom_call.1} parent=1 // pred_fallthru
      _
    // Predicated region
    $region18: #{tpu_custom_call.1} parent=1 // pred_check
      _
    $region19: #{tpu_custom_call.1} parent=1 // pred_check_branch
      %22 = sbr.rel (0) target = $region21
    $region20: #{tpu_custom_call.1} parent=1 // pred_region
      _
    $region21: #{tpu_custom_call.1} parent=1 // pred_fallthru
      _
    // Predicated region
    $region22: #{tpu_custom_call.1} parent=1 // pred_check
      _
    $region23: #{tpu_custom_call.1} parent=1 // pred_check_branch
      %24 = sbr.rel (0) target = $region25
    $region24: #{tpu_custom_call.1} parent=1 // pred_region
      _
    $region25: #{tpu_custom_call.1} parent=1 // pred_fallthru
      _
    // Predicated region
    $region26: #{tpu_custom_call.1} parent=1 // pred_check
      _
    $region27: #{tpu_custom_call.1} parent=1 // pred_check_branch
      %26 = sbr.rel (0) target = $region29
    $region28: #{tpu_custom_call.1} parent=1 // pred_region
      _
    $region29: #{tpu_custom_call.1} parent=1 // pred_fallthru
      _
    %v28 = vld [vmem:[%s0] sm:$0xff]
    %v29 = vld [vmem:[%s0 + $0x8] sm:$0xff]
    %v30 = vld [vmem:[%s0 + $0x10] sm:$0xff]
    %v31 = vld [vmem:[%s0 + $0x18] sm:$0xff]
    %v32 = vld [vmem:[%s1] sm:$0x3]
    %v33 = vld [vmem:[%s2] sm:$0x3]
    %vm34 = vcmask 130048
    %v35 = vsel %vm34, %v29, 0.0
    %v36 = vadd.f32 %v28, %v35
    %37 = vadd.xlane.f32.xlu0 %v36
    %v38 = vpop.xlane.xlu0 %37
    %v39 = vsel %vm34, %v31, 0.0
    %v40 = vadd.f32 %v30, %v39
    %41 = vadd.xlane.f32.xlu0 %v40
    %v42 = vpop.xlane.xlu0 %41
    %v43 = vrcp.pop 144.0
    %v44 = vmul.f32 %v38, %v43
    %v45 = vmul.f32 %v42, %v43
    %v46 = vsub.f32 %v28, %v44
    %v47 = vsub.f32 %v29, %v44
    %v48 = vsub.f32 %v30, %v45
    %v49 = vsub.f32 %v31, %v45
    %v50 = vmul.f32 %v46, %v46
    %v51 = vmul.f32 %v47, %v47
    %v52 = vmul.f32 %v48, %v48
    %v53 = vmul.f32 %v49, %v49
    %v54 = vsel %vm34, %v51, 0.0
    %v55 = vadd.f32 %v50, %v54
    %56 = vadd.xlane.f32.xlu0 %v55
    %v57 = vpop.xlane.xlu0 %56
    %v58 = vsel %vm34, %v53, 0.0
    %v59 = vadd.f32 %v52, %v58
    %60 = vadd.xlane.f32.xlu0 %v59
    %v61 = vpop.xlane.xlu0 %60
    %v62 = vmul.f32 %v57, %v43
    %v63 = vmul.f32 %v61, %v43
    %v64 = vadd.f32 %v62, 1e-05
    %v65 = vadd.f32 %v63, 1e-05
    %v66 = vrsqrt.pop %v64
    %v67 = vrsqrt.pop %v65
    %v68 = vmul.f32 %v46, %v66
    %v69 = vmul.f32 %v47, %v66
    %v70 = vmul.f32 %v48, %v67
    %v71 = vmul.f32 %v49, %v67
    %v73 = vlaneseq
    %v74 = vshrl.u32 %v73, 7
    %v75 = vsub.s32 0, %v74
    %v76 = vrot.slane %v32, %v75
    %v77 = vlaneseq
    %v78 = vshrl.u32 %v77, 7
    %v79 = vsub.s32 1, %v78
    %v80 = vrot.slane %v32, %v79
    %v83 = vmul.f32 %v68, %v76
    %v84 = vmul.f32 %v69, %v80
    %v85 = vmul.f32 %v70, %v76
    %v86 = vmul.f32 %v71, %v80
    %v88 = vlaneseq
    %v89 = vshrl.u32 %v88, 7
    %v90 = vsub.s32 0, %v89
    %v91 = vrot.slane %v33, %v90
    %v92 = vlaneseq
    %v93 = vshrl.u32 %v92, 7
    %v94 = vsub.s32 1, %v93
    %v95 = vrot.slane %v33, %v94
    %v98 = vadd.f32 %v83, %v91
    %v99 = vadd.f32 %v84, %v95
    %v100 = vadd.f32 %v85, %v91
    %v101 = vadd.f32 %v86, %v95
    %v102 = vpack.c.bf16 %v100, %v98
    %v103 = vpack.c.bf16 %v101, %v99
    %v104 = vld [vmem:[%s3] sm:$0xff]
    %v105 = vld [vmem:[%s3 + $0x8] sm:$0xff]
    %v106 = vld [vmem:[%s3 + $0x10] sm:$0xf]
    %v107 = vld [vmem:[%s3 + $0x14] sm:$0xff]
    %v108 = vld [vmem:[%s3 + $0x1c] sm:$0xff]
    %v109 = vld [vmem:[%s3 + $0x24] sm:$0xf]
    %v110 = vld [vmem:[%s3 + $0x28] sm:$0xff]
    %v111 = vld [vmem:[%s3 + $0x30] sm:$0xff]
    %v112 = vld [vmem:[%s3 + $0x38] sm:$0xf]
    %v113 = vld [vmem:[%s3 + $0x3c] sm:$0xff]
    %v114 = vld [vmem:[%s3 + $0x44] sm:$0xff]
    %v115 = vld [vmem:[%s3 + $0x4c] sm:$0xf]
    %v116 = vld [vmem:[%s3 + $0x50] sm:$0xff]
    %v117 = vld [vmem:[%s3 + $0x58] sm:$0xff]
    %v118 = vld [vmem:[%s3 + $0x60] sm:$0xf]
    %v119 = vld [vmem:[%s3 + $0x64] sm:$0xff]
    %v120 = vld [vmem:[%s3 + $0x6c] sm:$0xff]
    %v121 = vld [vmem:[%s3 + $0x74] sm:$0xf]
    %v122 = vld [vmem:[%s3 + $0x78] sm:$0xff]
    %v123 = vld [vmem:[%s3 + $0x80] sm:$0xff]
    %v124 = vld [vmem:[%s3 + $0x88] sm:$0xf]
    %v125 = vld [vmem:[%s3 + $0x8c] sm:$0xff]
    %v126 = vld [vmem:[%s3 + $0x94] sm:$0xff]
    %v127 = vld [vmem:[%s3 + $0x9c] sm:$0xf]
    %v128 = vld [vmem:[%s3 + $0xa0] sm:$0xff]
    %v129 = vld [vmem:[%s3 + $0xa8] sm:$0xff]
    %v130 = vld [vmem:[%s3 + $0xb0] sm:$0xf]
    %v131 = vld [vmem:[%s3 + $0xb4] sm:$0xff]
    %v132 = vld [vmem:[%s3 + $0xbc] sm:$0xff]
    %v133 = vld [vmem:[%s3 + $0xc4] sm:$0xf]
    %v134 = vld [vmem:[%s3 + $0xc8] sm:$0xff]
    %v135 = vld [vmem:[%s3 + $0xd0] sm:$0xff]
    %v136 = vld [vmem:[%s3 + $0xd8] sm:$0xf]
    %v137 = vld [vmem:[%s3 + $0xdc] sm:$0xff]
    %v138 = vld [vmem:[%s3 + $0xe4] sm:$0xff]
    %v139 = vld [vmem:[%s3 + $0xec] sm:$0xf]
    %v140 = vld [vmem:[%s3 + $0xf0] sm:$0xff]
    %v141 = vld [vmem:[%s3 + $0xf8] sm:$0xff]
    %v142 = vld [vmem:[%s3 + $0x100] sm:$0xf]
    %v143 = vld [vmem:[%s3 + $0x104] sm:$0xff]
    %v144 = vld [vmem:[%s3 + $0x10c] sm:$0xff]
    %v145 = vld [vmem:[%s3 + $0x114] sm:$0xf]
    %v146 = vld [vmem:[%s3 + $0x118] sm:$0xff]
    %v147 = vld [vmem:[%s3 + $0x120] sm:$0xff]
    %v148 = vld [vmem:[%s3 + $0x128] sm:$0xf]
    %v149 = vld [vmem:[%s3 + $0x12c] sm:$0xff]
    %v150 = vld [vmem:[%s3 + $0x134] sm:$0xff]
    %v151 = vld [vmem:[%s3 + $0x13c] sm:$0xf]
    %v152 = vld [vmem:[%s3 + $0x140] sm:$0xff]
    %v153 = vld [vmem:[%s3 + $0x148] sm:$0xff]
    %v154 = vld [vmem:[%s3 + $0x150] sm:$0xf]
    %v155 = vld [vmem:[%s3 + $0x154] sm:$0xff]
    %v156 = vld [vmem:[%s3 + $0x15c] sm:$0xff]
    %v157 = vld [vmem:[%s3 + $0x164] sm:$0xf]
    %v158 = vld [vmem:[%s4] sm:$0x1f]
    %v160 = vlaneseq
    %v161 = vshrl.u32 %v160, 7
    %v162 = vsub.s32 0, %v161
    %v163 = vrot.slane %v158, %v162
    %v164 = vlaneseq
    %v165 = vshrl.u32 %v164, 7
    %v166 = vsub.s32 1, %v165
    %v167 = vrot.slane %v158, %v166
    %v168 = vlaneseq
    %v169 = vshrl.u32 %v168, 7
    %v170 = vsub.s32 2, %v169
    %v171 = vrot.slane %v158, %v170
    %v172 = vlaneseq
    %v173 = vshrl.u32 %v172, 7
    %v174 = vsub.s32 3, %v173
    %v175 = vrot.slane %v158, %v174
    %v176 = vlaneseq
    %v177 = vshrl.u32 %v176, 7
    %v178 = vsub.s32 4, %v177
    %v179 = vrot.slane %v158, %v178
    %v239 = vunpack.c.l.b16 %v104
    %v240 = vunpack.c.h.b16 %v104
    %v241 = vunpack.c.l.b16 %v105
    %v242 = vunpack.c.h.b16 %v105
    %v243 = vunpack.c.l.b16 %v106
    %v244 = vunpack.c.l.b16 %v107
    %v245 = vunpack.c.h.b16 %v107
    %v246 = vunpack.c.l.b16 %v108
    %v247 = vunpack.c.h.b16 %v108
    %v248 = vunpack.c.l.b16 %v109
    %v249 = vunpack.c.l.b16 %v110
    %v250 = vunpack.c.h.b16 %v110
    %v251 = vunpack.c.l.b16 %v111
    %v252 = vunpack.c.h.b16 %v111
    %v253 = vunpack.c.l.b16 %v112
    %v254 = vunpack.c.l.b16 %v113
    %v255 = vunpack.c.h.b16 %v113
    %v256 = vunpack.c.l.b16 %v114
    %v257 = vunpack.c.h.b16 %v114
    %v258 = vunpack.c.l.b16 %v115
    %v259 = vunpack.c.l.b16 %v116
    %v260 = vunpack.c.h.b16 %v116
    %v261 = vunpack.c.l.b16 %v117
    %v262 = vunpack.c.h.b16 %v117
    %v263 = vunpack.c.l.b16 %v118
    %v264 = vunpack.c.l.b16 %v119
    %v265 = vunpack.c.h.b16 %v119
    %v266 = vunpack.c.l.b16 %v120
    %v267 = vunpack.c.h.b16 %v120
    %v268 = vunpack.c.l.b16 %v121
    %v269 = vunpack.c.l.b16 %v122
    %v270 = vunpack.c.h.b16 %v122
    %v271 = vunpack.c.l.b16 %v123
    %v272 = vunpack.c.h.b16 %v123
    %v273 = vunpack.c.l.b16 %v124
    %v274 = vunpack.c.l.b16 %v125
    %v275 = vunpack.c.h.b16 %v125
    %v276 = vunpack.c.l.b16 %v126
    %v277 = vunpack.c.h.b16 %v126
    %v278 = vunpack.c.l.b16 %v127
    %v279 = vunpack.c.l.b16 %v128
    %v280 = vunpack.c.h.b16 %v128
    %v281 = vunpack.c.l.b16 %v129
    %v282 = vunpack.c.h.b16 %v129
    %v283 = vunpack.c.l.b16 %v130
    %v284 = vunpack.c.l.b16 %v131
    %v285 = vunpack.c.h.b16 %v131
    %v286 = vunpack.c.l.b16 %v132
    %v287 = vunpack.c.h.b16 %v132
    %v288 = vunpack.c.l.b16 %v133
    %v289 = vunpack.c.l.b16 %v134
    %v290 = vunpack.c.h.b16 %v134
    %v291 = vunpack.c.l.b16 %v135
    %v292 = vunpack.c.h.b16 %v135
    %v293 = vunpack.c.l.b16 %v136
    %v294 = vunpack.c.l.b16 %v137
    %v295 = vunpack.c.h.b16 %v137
    %v296 = vunpack.c.l.b16 %v138
    %v297 = vunpack.c.h.b16 %v138
    %v298 = vunpack.c.l.b16 %v139
    %v299 = vunpack.c.l.b16 %v140
    %v300 = vunpack.c.h.b16 %v140
    %v301 = vunpack.c.l.b16 %v141
    %v302 = vunpack.c.h.b16 %v141
    %v303 = vunpack.c.l.b16 %v142
    %v304 = vunpack.c.l.b16 %v143
    %v305 = vunpack.c.h.b16 %v143
    %v306 = vunpack.c.l.b16 %v144
    %v307 = vunpack.c.h.b16 %v144
    %v308 = vunpack.c.l.b16 %v145
    %v309 = vunpack.c.l.b16 %v146
    %v310 = vunpack.c.h.b16 %v146
    %v311 = vunpack.c.l.b16 %v147
    %v312 = vunpack.c.h.b16 %v147
    %v313 = vunpack.c.l.b16 %v148
    %v314 = vunpack.c.l.b16 %v149
    %v315 = vunpack.c.h.b16 %v149
    %v316 = vunpack.c.l.b16 %v150
    %v317 = vunpack.c.h.b16 %v150
    %v318 = vunpack.c.l.b16 %v151
    %v319 = vunpack.c.l.b16 %v152
    %v320 = vunpack.c.h.b16 %v152
    %v321 = vunpack.c.l.b16 %v153
    %v322 = vunpack.c.h.b16 %v153
    %v323 = vunpack.c.l.b16 %v154
    %v324 = vunpack.c.l.b16 %v155
    %v325 = vunpack.c.h.b16 %v155
    %v326 = vunpack.c.l.b16 %v156
    %v327 = vunpack.c.h.b16 %v156
    %v328 = vunpack.c.l.b16 %v157
    %v329 = vpack.c.b16 %v244, %v239
    %v330 = vpack.c.b16 %v245, %v240
    %v331 = vpack.c.b16 %v246, %v241
    %v332 = vpack.c.b16 %v247, %v242
    %v333 = vpack.c.b16 %v248, %v243
    %v334 = vpack.c.b16 %v254, %v249
    %v335 = vpack.c.b16 %v255, %v250
    %v336 = vpack.c.b16 %v256, %v251
    %v337 = vpack.c.b16 %v257, %v252
    %v338 = vpack.c.b16 %v258, %v253
    %v339 = vpack.c.b16 %v264, %v259
    %v340 = vpack.c.b16 %v265, %v260
    %v341 = vpack.c.b16 %v266, %v261
    %v342 = vpack.c.b16 %v267, %v262
    %v343 = vpack.c.b16 %v268, %v263
    %v344 = vpack.c.b16 %v274, %v269
    %v345 = vpack.c.b16 %v275, %v270
    %v346 = vpack.c.b16 %v276, %v271
    %v347 = vpack.c.b16 %v277, %v272
    %v348 = vpack.c.b16 %v278, %v273
    %v349 = vpack.c.b16 %v284, %v279
    %v350 = vpack.c.b16 %v285, %v280
    %v351 = vpack.c.b16 %v286, %v281
    %v352 = vpack.c.b16 %v287, %v282
    %v353 = vpack.c.b16 %v288, %v283
    %v354 = vpack.c.b16 %v294, %v289
    %v355 = vpack.c.b16 %v295, %v290
    %v356 = vpack.c.b16 %v296, %v291
    %v357 = vpack.c.b16 %v297, %v292
    %v358 = vpack.c.b16 %v298, %v293
    %v359 = vpack.c.b16 %v304, %v299
    %v360 = vpack.c.b16 %v305, %v300
    %v361 = vpack.c.b16 %v306, %v301
    %v362 = vpack.c.b16 %v307, %v302
    %v363 = vpack.c.b16 %v308, %v303
    %v364 = vpack.c.b16 %v314, %v309
    %v365 = vpack.c.b16 %v315, %v310
    %v366 = vpack.c.b16 %v316, %v311
    %v367 = vpack.c.b16 %v317, %v312
    %v368 = vpack.c.b16 %v318, %v313
    %v369 = vpack.c.b16 %v324, %v319
    %v370 = vpack.c.b16 %v325, %v320
    %v371 = vpack.c.b16 %v326, %v321
    %v372 = vpack.c.b16 %v327, %v322
    %v373 = vpack.c.b16 %v328, %v323
    %v420 = vsel %vm34, %v103, 0
    %422 = vmatprep.subr.bf16.mxu0 %v330
    %423 = vmatpush1.bf16.msra.mxu0 %v329
    %424 = vmatprep.subr.bf16.mxu0 %v335
    %425 = vmatpush1.bf16.msra.mxu0 %v334
    %426 = vmatprep.subr.bf16.mxu0 %v340
    %427 = vmatpush1.bf16.msra.mxu0 %v339
    %428 = vmatprep.subr.bf16.mxu0 %v345
    %429 = vmatpush1.bf16.msra.mxu0 %v344
    %430 = vmatprep.subr.bf16.mxu0 %v350
    %431 = vmatpush1.bf16.msra.mxu0 %v349
    %432 = vmatprep.subr.bf16.mxu0 %v355
    %433 = vmatpush1.bf16.msra.mxu0 %v354
    %434 = vmatprep.subr.bf16.mxu0 %v360
    %435 = vmatpush1.bf16.msra.mxu0 %v359
    %436 = vmatprep.subr.bf16.mxu0 %v365
    %437 = vmatpush1.bf16.msra.mxu0 %v364
    %438 = vmatprep.subr.bf16.mxu0 %v370
    %439 = vmatpush1.bf16.msra.mxu0 %v369
    %440 = vmatprep.subr.bf16.mxu0 0
    %441 = vmatpush1.bf16.msra.mxu0 0
    %442 = vmatprep.subr.bf16.mxu0 0
    %443 = vmatpush1.bf16.msra.mxu0 0
    %444 = vmatprep.subr.bf16.mxu0 0
    %445 = vmatpush1.bf16.msra.mxu0 0
    %446 = vmatprep.subr.bf16.mxu0 0
    %447 = vmatpush1.bf16.msra.mxu0 0
    %448 = vmatprep.subr.bf16.mxu0 0
    %449 = vmatpush1.bf16.msra.mxu0 0
    %450 = vmatprep.subr.bf16.mxu0 0
    %451 = vmatpush1.bf16.msra.mxu0 0
    %452 = vmatprep.subr.bf16.mxu0 0
    %453 = vmatpush1.bf16.msra.mxu0 0
    %454 = vmatprep.mubr.bf16.mxu0 %v420
    %455 = vmatmul.mubr.bf16.gmra.mrb[0].mxu0 %v102
    %v456 = vpop.f32.mrb[0].mxu0
    %v457 = vadd.f32 %v163, %v456
    %v458 = vpop.f32.mrb[0].mxu0
    %v459 = vadd.f32 %v167, %v458
    %v460 = vpop.f32.mrb[0].mxu0
    %v461 = vadd.f32 %v163, %v460
    %v462 = vpop.f32.mrb[0].mxu0
    %v463 = vadd.f32 %v167, %v462
    %464 = vdwg.mxu0
    %465 = vmatprep.subr.bf16.mxu0 %v332
    %466 = vmatpush1.bf16.msra.mxu0 %v331
    %467 = vmatprep.subr.bf16.mxu0 %v337
    %468 = vmatpush1.bf16.msra.mxu0 %v336
    %469 = vmatprep.subr.bf16.mxu0 %v342
    %470 = vmatpush1.bf16.msra.mxu0 %v341
    %471 = vmatprep.subr.bf16.mxu0 %v347
    %472 = vmatpush1.bf16.msra.mxu0 %v346
    %473 = vmatprep.subr.bf16.mxu0 %v352
    %474 = vmatpush1.bf16.msra.mxu0 %v351
    %475 = vmatprep.subr.bf16.mxu0 %v357
    %476 = vmatpush1.bf16.msra.mxu0 %v356
    %477 = vmatprep.subr.bf16.mxu0 %v362
    %478 = vmatpush1.bf16.msra.mxu0 %v361
    %479 = vmatprep.subr.bf16.mxu0 %v367
    %480 = vmatpush1.bf16.msra.mxu0 %v366
    %481 = vmatprep.subr.bf16.mxu0 %v372
    %482 = vmatpush1.bf16.msra.mxu0 %v371
    %483 = vmatprep.subr.bf16.mxu0 0
    %484 = vmatpush1.bf16.msra.mxu0 0
    %485 = vmatprep.subr.bf16.mxu0 0
    %486 = vmatpush1.bf16.msra.mxu0 0
    %487 = vmatprep.subr.bf16.mxu0 0
    %488 = vmatpush1.bf16.msra.mxu0 0
    %489 = vmatprep.subr.bf16.mxu0 0
    %490 = vmatpush1.bf16.msra.mxu0 0
    %491 = vmatprep.subr.bf16.mxu0 0
    %492 = vmatpush1.bf16.msra.mxu0 0
    %493 = vmatprep.subr.bf16.mxu0 0
    %494 = vmatpush1.bf16.msra.mxu0 0
    %495 = vmatprep.subr.bf16.mxu0 0
    %496 = vmatpush1.bf16.msra.mxu0 0
    %497 = vmatprep.mubr.bf16.mxu0 %v420
    %498 = vmatmul.mubr.bf16.gmra.mrb[0].mxu0 %v102
    %v499 = vpop.f32.mrb[0].mxu0
    %v500 = vadd.f32 %v171, %v499
    %v501 = vpop.f32.mrb[0].mxu0
    %v502 = vadd.f32 %v175, %v501
    %v503 = vpop.f32.mrb[0].mxu0
    %v504 = vadd.f32 %v171, %v503
    %v505 = vpop.f32.mrb[0].mxu0
    %v506 = vadd.f32 %v175, %v505
    %507 = vdwg.mxu0
    %508 = vmatprep.subr.bf16.mxu0 0
    %509 = vmatpush1.bf16.msra.mxu0 %v333
    %510 = vmatprep.subr.bf16.mxu0 0
    %511 = vmatpush1.bf16.msra.mxu0 %v338
    %512 = vmatprep.subr.bf16.mxu0 0
    %513 = vmatpush1.bf16.msra.mxu0 %v343
    %514 = vmatprep.subr.bf16.mxu0 0
    %515 = vmatpush1.bf16.msra.mxu0 %v348
    %516 = vmatprep.subr.bf16.mxu0 0
    %517 = vmatpush1.bf16.msra.mxu0 %v353
    %518 = vmatprep.subr.bf16.mxu0 0
    %519 = vmatpush1.bf16.msra.mxu0 %v358
    %520 = vmatprep.subr.bf16.mxu0 0
    %521 = vmatpush1.bf16.msra.mxu0 %v363
    %522 = vmatprep.subr.bf16.mxu0 0
    %523 = vmatpush1.bf16.msra.mxu0 %v368
    %524 = vmatprep.subr.bf16.mxu0 0
    %525 = vmatpush1.bf16.msra.mxu0 %v373
    %526 = vmatprep.subr.bf16.mxu0 0
    %527 = vmatpush1.bf16.msra.mxu0 0
    %528 = vmatprep.subr.bf16.mxu0 0
    %529 = vmatpush1.bf16.msra.mxu0 0
    %530 = vmatprep.subr.bf16.mxu0 0
    %531 = vmatpush1.bf16.msra.mxu0 0
    %532 = vmatprep.subr.bf16.mxu0 0
    %533 = vmatpush1.bf16.msra.mxu0 0
    %534 = vmatprep.subr.bf16.mxu0 0
    %535 = vmatpush1.bf16.msra.mxu0 0
    %536 = vmatprep.subr.bf16.mxu0 0
    %537 = vmatpush1.bf16.msra.mxu0 0
    %538 = vmatprep.subr.bf16.mxu0 0
    %539 = vmatpush1.bf16.msra.mxu0 0
    %540 = vmatprep.mubr.bf16.mxu0 %v420
    %541 = vmatmul.mubr.bf16.gmra.mrb[0].mxu0 %v102
    %v542 = vpop.f32.mrb[0].mxu0
    %v543 = vadd.f32 %v179, %v542
    %v544 = vpop.f32.mrb[0].mxu0
    %v545 = vpop.f32.mrb[0].mxu0
    %v546 = vadd.f32 %v179, %v545
    %v547 = vpop.f32.mrb[0].mxu0
    %548 = vdwg.mxu0
    %v549 = vxor.u32 %v457, 2147483648
    %v550 = vxor.u32 %v459, 2147483648
    %v551 = vxor.u32 %v500, 2147483648
    %v552 = vxor.u32 %v502, 2147483648
    %v553 = vxor.u32 %v543, 2147483648
    %v554 = vxor.u32 %v461, 2147483648
    %v555 = vxor.u32 %v463, 2147483648
    %v556 = vxor.u32 %v504, 2147483648
    %v557 = vxor.u32 %v506, 2147483648
    %v558 = vxor.u32 %v546, 2147483648
    %v559 = vmul.f32 %v549, 1.442695
    %v560 = vpow.pop %v559
    %v561 = vmul.f32 %v550, 1.442695
    %v562 = vpow.pop %v561
    %v563 = vmul.f32 %v551, 1.442695
    %v564 = vpow.pop %v563
    %v565 = vmul.f32 %v552, 1.442695
    %v566 = vpow.pop %v565
    %v567 = vmul.f32 %v553, 1.442695
    %v568 = vpow.pop %v567
    %v569 = vmul.f32 %v554, 1.442695
    %v570 = vpow.pop %v569
    %v571 = vmul.f32 %v555, 1.442695
    %v572 = vpow.pop %v571
    %v573 = vmul.f32 %v556, 1.442695
    %v574 = vpow.pop %v573
    %v575 = vmul.f32 %v557, 1.442695
    %v576 = vpow.pop %v575
    %v577 = vmul.f32 %v558, 1.442695
    %v578 = vpow.pop %v577
    %v579 = vadd.f32 %v560, 1.0
    %v580 = vadd.f32 %v562, 1.0
    %v581 = vadd.f32 %v564, 1.0
    %v582 = vadd.f32 %v566, 1.0
    %v583 = vadd.f32 %v568, 1.0
    %v584 = vadd.f32 %v570, 1.0
    %v585 = vadd.f32 %v572, 1.0
    %v586 = vadd.f32 %v574, 1.0
    %v587 = vadd.f32 %v576, 1.0
    %v588 = vadd.f32 %v578, 1.0
    %v589 = vrcp.pop %v579
    %v590 = vmul.f32 1.0, %v589
    %v591 = vrcp.pop %v580
    %v592 = vmul.f32 1.0, %v591
    %v593 = vrcp.pop %v581
    %v594 = vmul.f32 1.0, %v593
    %v595 = vrcp.pop %v582
    %v596 = vmul.f32 1.0, %v595
    %v597 = vrcp.pop %v583
    %v598 = vmul.f32 1.0, %v597
    %v599 = vrcp.pop %v584
    %v600 = vmul.f32 1.0, %v599
    %v601 = vrcp.pop %v585
    %v602 = vmul.f32 1.0, %v601
    %v603 = vrcp.pop %v586
    %v604 = vmul.f32 1.0, %v603
    %v605 = vrcp.pop %v587
    %v606 = vmul.f32 1.0, %v605
    %v607 = vrcp.pop %v588
    %v608 = vmul.f32 1.0, %v607
    %v609 = vmul.f32 %v457, %v590
    %v610 = vmul.f32 %v459, %v592
    %v611 = vmul.f32 %v500, %v594
    %v612 = vmul.f32 %v502, %v596
    %v613 = vmul.f32 %v543, %v598
    %v614 = vmul.f32 %v461, %v600
    %v615 = vmul.f32 %v463, %v602
    %v616 = vmul.f32 %v504, %v604
    %v617 = vmul.f32 %v506, %v606
    %v618 = vmul.f32 %v546, %v608
    %v619 = vpack.c.bf16 %v614, %v609
    %v620 = vpack.c.bf16 %v615, %v610
    %v621 = vpack.c.bf16 %v616, %v611
    %v622 = vpack.c.bf16 %v617, %v612
    %v623 = vpack.c.bf16 %v618, %v613
    %v624 = vld [vmem:[%s5] sm:$0xff]
    %v625 = vld [vmem:[%s5 + $0x8] sm:$0xff]
    %v626 = vld [vmem:[%s5 + $0x10] sm:$0xff]
    %v627 = vld [vmem:[%s5 + $0x18] sm:$0xff]
    %v628 = vld [vmem:[%s5 + $0x20] sm:$0xff]
    %v629 = vld [vmem:[%s5 + $0x28] sm:$0xff]
    %v630 = vld [vmem:[%s5 + $0x30] sm:$0xff]
    %v631 = vld [vmem:[%s5 + $0x38] sm:$0xff]
    %v632 = vld [vmem:[%s5 + $0x40] sm:$0xff]
    %v633 = vld [vmem:[%s5 + $0x48] sm:$0xff]
    %v634 = vld [vmem:[%s5 + $0x50] sm:$0xff]
    %v635 = vld [vmem:[%s5 + $0x58] sm:$0xff]
    %v636 = vld [vmem:[%s5 + $0x60] sm:$0xff]
    %v637 = vld [vmem:[%s5 + $0x68] sm:$0xff]
    %v638 = vld [vmem:[%s5 + $0x70] sm:$0xff]
    %v639 = vld [vmem:[%s5 + $0x78] sm:$0xff]
    %v640 = vld [vmem:[%s5 + $0x80] sm:$0xff]
    %v641 = vld [vmem:[%s5 + $0x88] sm:$0xff]
    %v642 = vld [vmem:[%s5 + $0x90] sm:$0xff]
    %v643 = vld [vmem:[%s5 + $0x98] sm:$0xff]
    %v644 = vld [vmem:[%s5 + $0xa0] sm:$0xff]
    %v645 = vld [vmem:[%s5 + $0xa8] sm:$0xff]
    %v646 = vld [vmem:[%s5 + $0xb0] sm:$0xff]
    %v647 = vld [vmem:[%s5 + $0xb8] sm:$0xff]
    %v648 = vld [vmem:[%s5 + $0xc0] sm:$0xff]
    %v649 = vld [vmem:[%s5 + $0xc8] sm:$0xff]
    %v650 = vld [vmem:[%s5 + $0xd0] sm:$0xff]
    %v651 = vld [vmem:[%s5 + $0xd8] sm:$0xff]
    %v652 = vld [vmem:[%s5 + $0xe0] sm:$0xff]
    %v653 = vld [vmem:[%s5 + $0xe8] sm:$0xff]
    %v654 = vld [vmem:[%s5 + $0xf0] sm:$0xff]
    %v655 = vld [vmem:[%s5 + $0xf8] sm:$0xff]
    %v656 = vld [vmem:[%s5 + $0x100] sm:$0xff]
    %v657 = vld [vmem:[%s5 + $0x108] sm:$0xff]
    %v658 = vld [vmem:[%s5 + $0x110] sm:$0xff]
    %v659 = vld [vmem:[%s5 + $0x118] sm:$0xff]
    %v660 = vld [vmem:[%s5 + $0x120] sm:$0xff]
    %v661 = vld [vmem:[%s5 + $0x128] sm:$0xff]
    %v662 = vld [vmem:[%s5 + $0x130] sm:$0xff]
    %v663 = vld [vmem:[%s5 + $0x138] sm:$0xff]
    %v664 = vld [vmem:[%s5 + $0x140] sm:$0xff]
    %v665 = vld [vmem:[%s5 + $0x148] sm:$0xff]
    %v666 = vld [vmem:[%s5 + $0x150] sm:$0xff]
    %v667 = vld [vmem:[%s5 + $0x158] sm:$0xff]
    %v668 = vld [vmem:[%s5 + $0x160] sm:$0xff]
    %v669 = vld [vmem:[%s5 + $0x168] sm:$0xff]
    %v670 = vld [vmem:[%s5 + $0x170] sm:$0xff]
    %v671 = vld [vmem:[%s5 + $0x178] sm:$0xff]
    %v672 = vld [vmem:[%s5 + $0x180] sm:$0xff]
    %v673 = vld [vmem:[%s5 + $0x188] sm:$0xff]
    %v674 = vld [vmem:[%s5 + $0x190] sm:$0xff]
    %v675 = vld [vmem:[%s5 + $0x198] sm:$0xff]
    %v676 = vld [vmem:[%s5 + $0x1a0] sm:$0xff]
    %v677 = vld [vmem:[%s5 + $0x1a8] sm:$0xff]
    %v678 = vld [vmem:[%s5 + $0x1b0] sm:$0xff]
    %v679 = vld [vmem:[%s5 + $0x1b8] sm:$0xff]
    %v680 = vld [vmem:[%s5 + $0x1c0] sm:$0xff]
    %v681 = vld [vmem:[%s5 + $0x1c8] sm:$0xff]
    %v682 = vld [vmem:[%s5 + $0x1d0] sm:$0xff]
    %v683 = vld [vmem:[%s5 + $0x1d8] sm:$0xff]
    %v684 = vld [vmem:[%s5 + $0x1e0] sm:$0xff]
    %v685 = vld [vmem:[%s5 + $0x1e8] sm:$0xff]
    %v686 = vld [vmem:[%s5 + $0x1f0] sm:$0xff]
    %v687 = vld [vmem:[%s5 + $0x1f8] sm:$0xff]
    %v688 = vld [vmem:[%s5 + $0x200] sm:$0xff]
    %v689 = vld [vmem:[%s5 + $0x208] sm:$0xff]
    %v690 = vld [vmem:[%s5 + $0x210] sm:$0xff]
    %v691 = vld [vmem:[%s5 + $0x218] sm:$0xff]
    %v692 = vld [vmem:[%s5 + $0x220] sm:$0xff]
    %v693 = vld [vmem:[%s5 + $0x228] sm:$0xff]
    %v694 = vld [vmem:[%s5 + $0x230] sm:$0xff]
    %v695 = vld [vmem:[%s5 + $0x238] sm:$0xff]
    %v696 = vld [vmem:[%s6] sm:$0x3]
    %v698 = vlaneseq
    %v699 = vshrl.u32 %v698, 7
    %v700 = vsub.s32 0, %v699
    %v701 = vrot.slane %v696, %v700
    %v702 = vlaneseq
    %v703 = vshrl.u32 %v702, 7
    %v704 = vsub.s32 1, %v703
    %v705 = vrot.slane %v696, %v704
    %v780 = vunpack.c.l.b16 %v624
    %v781 = vunpack.c.h.b16 %v624
    %v782 = vunpack.c.l.b16 %v625
    %v783 = vunpack.c.h.b16 %v625
    %v784 = vunpack.c.l.b16 %v626
    %v785 = vunpack.c.h.b16 %v626
    %v786 = vunpack.c.l.b16 %v627
    %v787 = vunpack.c.h.b16 %v627
    %v788 = vunpack.c.l.b16 %v628
    %v789 = vunpack.c.h.b16 %v628
    %v790 = vunpack.c.l.b16 %v629
    %v791 = vunpack.c.h.b16 %v629
    %v792 = vunpack.c.l.b16 %v630
    %v793 = vunpack.c.h.b16 %v630
    %v794 = vunpack.c.l.b16 %v631
    %v795 = vunpack.c.h.b16 %v631
    %v796 = vunpack.c.l.b16 %v632
    %v797 = vunpack.c.h.b16 %v632
    %v798 = vunpack.c.l.b16 %v633
    %v799 = vunpack.c.h.b16 %v633
    %v800 = vunpack.c.l.b16 %v634
    %v801 = vunpack.c.h.b16 %v634
    %v802 = vunpack.c.l.b16 %v635
    %v803 = vunpack.c.h.b16 %v635
    %v804 = vunpack.c.l.b16 %v636
    %v805 = vunpack.c.h.b16 %v636
    %v806 = vunpack.c.l.b16 %v637
    %v807 = vunpack.c.h.b16 %v637
    %v808 = vunpack.c.l.b16 %v638
    %v809 = vunpack.c.h.b16 %v638
    %v810 = vunpack.c.l.b16 %v639
    %v811 = vunpack.c.h.b16 %v639
    %v812 = vunpack.c.l.b16 %v640
    %v813 = vunpack.c.h.b16 %v640
    %v814 = vunpack.c.l.b16 %v641
    %v815 = vunpack.c.h.b16 %v641
    %v816 = vunpack.c.l.b16 %v642
    %v817 = vunpack.c.h.b16 %v642
    %v818 = vunpack.c.l.b16 %v643
    %v819 = vunpack.c.h.b16 %v643
    %v820 = vunpack.c.l.b16 %v644
    %v821 = vunpack.c.h.b16 %v644
    %v822 = vunpack.c.l.b16 %v645
    %v823 = vunpack.c.h.b16 %v645
    %v824 = vunpack.c.l.b16 %v646
    %v825 = vunpack.c.h.b16 %v646
    %v826 = vunpack.c.l.b16 %v647
    %v827 = vunpack.c.h.b16 %v647
    %v828 = vunpack.c.l.b16 %v648
    %v829 = vunpack.c.h.b16 %v648
    %v830 = vunpack.c.l.b16 %v649
    %v831 = vunpack.c.h.b16 %v649
    %v832 = vunpack.c.l.b16 %v650
    %v833 = vunpack.c.h.b16 %v650
    %v834 = vunpack.c.l.b16 %v651
    %v835 = vunpack.c.h.b16 %v651
    %v836 = vunpack.c.l.b16 %v652
    %v837 = vunpack.c.h.b16 %v652
    %v838 = vunpack.c.l.b16 %v653
    %v839 = vunpack.c.h.b16 %v653
    %v840 = vunpack.c.l.b16 %v654
    %v841 = vunpack.c.h.b16 %v654
    %v842 = vunpack.c.l.b16 %v655
    %v843 = vunpack.c.h.b16 %v655
    %v844 = vunpack.c.l.b16 %v656
    %v845 = vunpack.c.h.b16 %v656
    %v846 = vunpack.c.l.b16 %v657
    %v847 = vunpack.c.h.b16 %v657
    %v848 = vunpack.c.l.b16 %v658
    %v849 = vunpack.c.h.b16 %v658
    %v850 = vunpack.c.l.b16 %v659
    %v851 = vunpack.c.h.b16 %v659
    %v852 = vunpack.c.l.b16 %v660
    %v853 = vunpack.c.h.b16 %v660
    %v854 = vunpack.c.l.b16 %v661
    %v855 = vunpack.c.h.b16 %v661
    %v856 = vunpack.c.l.b16 %v662
    %v857 = vunpack.c.h.b16 %v662
    %v858 = vunpack.c.l.b16 %v663
    %v859 = vunpack.c.h.b16 %v663
    %v860 = vunpack.c.l.b16 %v664
    %v861 = vunpack.c.h.b16 %v664
    %v862 = vunpack.c.l.b16 %v665
    %v863 = vunpack.c.h.b16 %v665
    %v864 = vunpack.c.l.b16 %v666
    %v865 = vunpack.c.h.b16 %v666
    %v866 = vunpack.c.l.b16 %v667
    %v867 = vunpack.c.h.b16 %v667
    %v868 = vunpack.c.l.b16 %v668
    %v869 = vunpack.c.h.b16 %v668
    %v870 = vunpack.c.l.b16 %v669
    %v871 = vunpack.c.h.b16 %v669
    %v872 = vunpack.c.l.b16 %v670
    %v873 = vunpack.c.h.b16 %v670
    %v874 = vunpack.c.l.b16 %v671
    %v875 = vunpack.c.h.b16 %v671
    %v876 = vunpack.c.l.b16 %v672
    %v877 = vunpack.c.h.b16 %v672
    %v878 = vunpack.c.l.b16 %v673
    %v879 = vunpack.c.h.b16 %v673
    %v880 = vunpack.c.l.b16 %v674
    %v881 = vunpack.c.h.b16 %v674
    %v882 = vunpack.c.l.b16 %v675
    %v883 = vunpack.c.h.b16 %v675
    %v884 = vunpack.c.l.b16 %v676
    %v885 = vunpack.c.h.b16 %v676
    %v886 = vunpack.c.l.b16 %v677
    %v887 = vunpack.c.h.b16 %v677
    %v888 = vunpack.c.l.b16 %v678
    %v889 = vunpack.c.h.b16 %v678
    %v890 = vunpack.c.l.b16 %v679
    %v891 = vunpack.c.h.b16 %v679
    %v892 = vunpack.c.l.b16 %v680
    %v893 = vunpack.c.h.b16 %v680
    %v894 = vunpack.c.l.b16 %v681
    %v895 = vunpack.c.h.b16 %v681
    %v896 = vunpack.c.l.b16 %v682
    %v897 = vunpack.c.h.b16 %v682
    %v898 = vunpack.c.l.b16 %v683
    %v899 = vunpack.c.h.b16 %v683
    %v900 = vunpack.c.l.b16 %v684
    %v901 = vunpack.c.h.b16 %v684
    %v902 = vunpack.c.l.b16 %v685
    %v903 = vunpack.c.h.b16 %v685
    %v904 = vunpack.c.l.b16 %v686
    %v905 = vunpack.c.h.b16 %v686
    %v906 = vunpack.c.l.b16 %v687
    %v907 = vunpack.c.h.b16 %v687
    %v908 = vunpack.c.l.b16 %v688
    %v909 = vunpack.c.h.b16 %v688
    %v910 = vunpack.c.l.b16 %v689
    %v911 = vunpack.c.h.b16 %v689
    %v912 = vunpack.c.l.b16 %v690
    %v913 = vunpack.c.h.b16 %v690
    %v914 = vunpack.c.l.b16 %v691
    %v915 = vunpack.c.h.b16 %v691
    %v916 = vunpack.c.l.b16 %v692
    %v917 = vunpack.c.h.b16 %v692
    %v918 = vunpack.c.l.b16 %v693
    %v919 = vunpack.c.h.b16 %v693
    %v920 = vunpack.c.l.b16 %v694
    %v921 = vunpack.c.h.b16 %v694
    %v922 = vunpack.c.l.b16 %v695
    %v923 = vunpack.c.h.b16 %v695
    %v924 = vpack.c.b16 %v782, %v780
    %v925 = vpack.c.b16 %v783, %v781
    %v926 = vpack.c.b16 %v786, %v784
    %v927 = vpack.c.b16 %v787, %v785
    %v928 = vpack.c.b16 %v790, %v788
    %v929 = vpack.c.b16 %v791, %v789
    %v930 = vpack.c.b16 %v794, %v792
    %v931 = vpack.c.b16 %v795, %v793
    %v932 = vpack.c.b16 %v798, %v796
    %v933 = vpack.c.b16 %v799, %v797
    %v934 = vpack.c.b16 %v802, %v800
    %v935 = vpack.c.b16 %v803, %v801
    %v936 = vpack.c.b16 %v806, %v804
    %v937 = vpack.c.b16 %v807, %v805
    %v938 = vpack.c.b16 %v810, %v808
    %v939 = vpack.c.b16 %v811, %v809
    %v940 = vpack.c.b16 %v814, %v812
    %v941 = vpack.c.b16 %v815, %v813
    %v942 = vpack.c.b16 %v818, %v816
    %v943 = vpack.c.b16 %v819, %v817
    %v944 = vpack.c.b16 %v822, %v820
    %v945 = vpack.c.b16 %v823, %v821
    %v946 = vpack.c.b16 %v826, %v824
    %v947 = vpack.c.b16 %v827, %v825
    %v948 = vpack.c.b16 %v830, %v828
    %v949 = vpack.c.b16 %v831, %v829
    %v950 = vpack.c.b16 %v834, %v832
    %v951 = vpack.c.b16 %v835, %v833
    %v952 = vpack.c.b16 %v838, %v836
    %v953 = vpack.c.b16 %v839, %v837
    %v954 = vpack.c.b16 %v842, %v840
    %v955 = vpack.c.b16 %v843, %v841
    %v956 = vpack.c.b16 %v846, %v844
    %v957 = vpack.c.b16 %v847, %v845
    %v958 = vpack.c.b16 %v850, %v848
    %v959 = vpack.c.b16 %v851, %v849
    %v960 = vpack.c.b16 %v854, %v852
    %v961 = vpack.c.b16 %v855, %v853
    %v962 = vpack.c.b16 %v858, %v856
    %v963 = vpack.c.b16 %v859, %v857
    %v964 = vpack.c.b16 %v862, %v860
    %v965 = vpack.c.b16 %v863, %v861
    %v966 = vpack.c.b16 %v866, %v864
    %v967 = vpack.c.b16 %v867, %v865
    %v968 = vpack.c.b16 %v870, %v868
    %v969 = vpack.c.b16 %v871, %v869
    %v970 = vpack.c.b16 %v874, %v872
    %v971 = vpack.c.b16 %v875, %v873
    %v972 = vpack.c.b16 %v878, %v876
    %v973 = vpack.c.b16 %v879, %v877
    %v974 = vpack.c.b16 %v882, %v880
    %v975 = vpack.c.b16 %v883, %v881
    %v976 = vpack.c.b16 %v886, %v884
    %v977 = vpack.c.b16 %v887, %v885
    %v978 = vpack.c.b16 %v890, %v888
    %v979 = vpack.c.b16 %v891, %v889
    %v980 = vpack.c.b16 %v894, %v892
    %v981 = vpack.c.b16 %v895, %v893
    %v982 = vpack.c.b16 %v898, %v896
    %v983 = vpack.c.b16 %v899, %v897
    %v984 = vpack.c.b16 %v902, %v900
    %v985 = vpack.c.b16 %v903, %v901
    %v986 = vpack.c.b16 %v906, %v904
    %v987 = vpack.c.b16 %v907, %v905
    %v988 = vpack.c.b16 %v910, %v908
    %v989 = vpack.c.b16 %v911, %v909
    %v990 = vpack.c.b16 %v914, %v912
    %v991 = vpack.c.b16 %v915, %v913
    %v992 = vpack.c.b16 %v918, %v916
    %v993 = vpack.c.b16 %v919, %v917
    %v994 = vpack.c.b16 %v922, %v920
    %v995 = vpack.c.b16 %v923, %v921
    %vm1068 = vcmask 523264
    %v1070 = vsel %vm1068, %v623, 0
    %1072 = vmatprep.subr.bf16.mxu0 %v925
    %1073 = vmatpush1.bf16.msra.mxu0 %v924
    %1074 = vmatprep.subr.bf16.mxu0 %v927
    %1075 = vmatpush1.bf16.msra.mxu0 %v926
    %1076 = vmatprep.subr.bf16.mxu0 %v929
    %1077 = vmatpush1.bf16.msra.mxu0 %v928
    %1078 = vmatprep.subr.bf16.mxu0 %v931
    %1079 = vmatpush1.bf16.msra.mxu0 %v930
    %1080 = vmatprep.subr.bf16.mxu0 %v933
    %1081 = vmatpush1.bf16.msra.mxu0 %v932
    %1082 = vmatprep.subr.bf16.mxu0 %v935
    %1083 = vmatpush1.bf16.msra.mxu0 %v934
    %1084 = vmatprep.subr.bf16.mxu0 %v937
    %1085 = vmatpush1.bf16.msra.mxu0 %v936
    %1086 = vmatprep.subr.bf16.mxu0 %v939
    %1087 = vmatpush1.bf16.msra.mxu0 %v938
    %1088 = vmatprep.subr.bf16.mxu0 %v941
    %1089 = vmatpush1.bf16.msra.mxu0 %v940
    %1090 = vmatprep.subr.bf16.mxu0 %v943
    %1091 = vmatpush1.bf16.msra.mxu0 %v942
    %1092 = vmatprep.subr.bf16.mxu0 %v945
    %1093 = vmatpush1.bf16.msra.mxu0 %v944
    %1094 = vmatprep.subr.bf16.mxu0 %v947
    %1095 = vmatpush1.bf16.msra.mxu0 %v946
    %1096 = vmatprep.subr.bf16.mxu0 %v949
    %1097 = vmatpush1.bf16.msra.mxu0 %v948
    %1098 = vmatprep.subr.bf16.mxu0 %v951
    %1099 = vmatpush1.bf16.msra.mxu0 %v950
    %1100 = vmatprep.subr.bf16.mxu0 %v953
    %1101 = vmatpush1.bf16.msra.mxu0 %v952
    %1102 = vmatprep.subr.bf16.mxu0 %v955
    %1103 = vmatpush1.bf16.msra.mxu0 %v954
    %1104 = vmatprep.mubr.bf16.mxu0 %v620
    %1105 = vmatmul.mubr.bf16.gmra.mrb[0].mxu0 %v619
    %v1106 = vpop.f32.mrb[0].mxu0
    %v1107 = vadd.f32 %v701, %v1106
    %v1108 = vpop.f32.mrb[0].mxu0
    %v1109 = vadd.f32 %v705, %v1108
    %v1110 = vpop.f32.mrb[0].mxu0
    %v1111 = vadd.f32 %v701, %v1110
    %v1112 = vpop.f32.mrb[0].mxu0
    %v1113 = vadd.f32 %v705, %v1112
    %1114 = vdwg.mxu0
    %1115 = vmatprep.subr.bf16.mxu0 %v957
    %1116 = vmatpush1.bf16.msra.mxu0 %v956
    %1117 = vmatprep.subr.bf16.mxu0 %v959
    %1118 = vmatpush1.bf16.msra.mxu0 %v958
    %1119 = vmatprep.subr.bf16.mxu0 %v961
    %1120 = vmatpush1.bf16.msra.mxu0 %v960
    %1121 = vmatprep.subr.bf16.mxu0 %v963
    %1122 = vmatpush1.bf16.msra.mxu0 %v962
    %1123 = vmatprep.subr.bf16.mxu0 %v965
    %1124 = vmatpush1.bf16.msra.mxu0 %v964
    %1125 = vmatprep.subr.bf16.mxu0 %v967
    %1126 = vmatpush1.bf16.msra.mxu0 %v966
    %1127 = vmatprep.subr.bf16.mxu0 %v969
    %1128 = vmatpush1.bf16.msra.mxu0 %v968
    %1129 = vmatprep.subr.bf16.mxu0 %v971
    %1130 = vmatpush1.bf16.msra.mxu0 %v970
    %1131 = vmatprep.subr.bf16.mxu0 %v973
    %1132 = vmatpush1.bf16.msra.mxu0 %v972
    %1133 = vmatprep.subr.bf16.mxu0 %v975
    %1134 = vmatpush1.bf16.msra.mxu0 %v974
    %1135 = vmatprep.subr.bf16.mxu0 %v977
    %1136 = vmatpush1.bf16.msra.mxu0 %v976
    %1137 = vmatprep.subr.bf16.mxu0 %v979
    %1138 = vmatpush1.bf16.msra.mxu0 %v978
    %1139 = vmatprep.subr.bf16.mxu0 %v981
    %1140 = vmatpush1.bf16.msra.mxu0 %v980
    %1141 = vmatprep.subr.bf16.mxu0 %v983
    %1142 = vmatpush1.bf16.msra.mxu0 %v982
    %1143 = vmatprep.subr.bf16.mxu0 %v985
    %1144 = vmatpush1.bf16.msra.mxu0 %v984
    %1145 = vmatprep.subr.bf16.mxu0 %v987
    %1146 = vmatpush1.bf16.msra.mxu0 %v986
    %1147 = vmatprep.mubr.bf16.mxu0 %v622
    %1148 = vmatmul.mubr.bf16.gmra.mrb[0].mxu0 %v621
    %v1149 = vpop.f32.mrb[0].mxu0
    %v1150 = vadd.f32 %v1107, %v1149
    %v1151 = vpop.f32.mrb[0].mxu0
    %v1152 = vadd.f32 %v1109, %v1151
    %v1153 = vpop.f32.mrb[0].mxu0
    %v1154 = vadd.f32 %v1111, %v1153
    %v1155 = vpop.f32.mrb[0].mxu0
    %v1156 = vadd.f32 %v1113, %v1155
    %1157 = vdwg.mxu0
    %1158 = vmatprep.subr.bf16.mxu0 %v989
    %1159 = vmatpush1.bf16.msra.mxu0 %v988
    %1160 = vmatprep.subr.bf16.mxu0 %v991
    %1161 = vmatpush1.bf16.msra.mxu0 %v990
    %1162 = vmatprep.subr.bf16.mxu0 %v993
    %1163 = vmatpush1.bf16.msra.mxu0 %v992
    %1164 = vmatprep.subr.bf16.mxu0 %v995
    %1165 = vmatpush1.bf16.msra.mxu0 %v994
    %1166 = vmatprep.subr.bf16.mxu0 0
    %1167 = vmatpush1.bf16.msra.mxu0 0
    %1168 = vmatprep.subr.bf16.mxu0 0
    %1169 = vmatpush1.bf16.msra.mxu0 0
    %1170 = vmatprep.subr.bf16.mxu0 0
    %1171 = vmatpush1.bf16.msra.mxu0 0
    %1172 = vmatprep.subr.bf16.mxu0 0
    %1173 = vmatpush1.bf16.msra.mxu0 0
    %1174 = vmatprep.subr.bf16.mxu0 0
    %1175 = vmatpush1.bf16.msra.mxu0 0
    %1176 = vmatprep.subr.bf16.mxu0 0
    %1177 = vmatpush1.bf16.msra.mxu0 0
    %1178 = vmatprep.subr.bf16.mxu0 0
    %1179 = vmatpush1.bf16.msra.mxu0 0
    %1180 = vmatprep.subr.bf16.mxu0 0
    %1181 = vmatpush1.bf16.msra.mxu0 0
    %1182 = vmatprep.subr.bf16.mxu0 0
    %1183 = vmatpush1.bf16.msra.mxu0 0
    %1184 = vmatprep.subr.bf16.mxu0 0
    %1185 = vmatpush1.bf16.msra.mxu0 0
    %1186 = vmatprep.subr.bf16.mxu0 0
    %1187 = vmatpush1.bf16.msra.mxu0 0
    %1188 = vmatprep.subr.bf16.mxu0 0
    %1189 = vmatpush1.bf16.msra.mxu0 0
    %1190 = vmatprep.mubr.bf16.mxu0 0
    %1191 = vmatmul.mubr.bf16.gmra.mrb[0].mxu0 %v1070
    %v1192 = vpop.f32.mrb[0].mxu0
    %v1193 = vadd.f32 %v1150, %v1192
    %v1194 = vpop.f32.mrb[0].mxu0
    %v1195 = vadd.f32 %v1152, %v1194
    %v1196 = vpop.f32.mrb[0].mxu0
    %v1197 = vadd.f32 %v1154, %v1196
    %v1198 = vpop.f32.mrb[0].mxu0
    %v1199 = vadd.f32 %v1156, %v1198
    %1200 = vdwg.mxu0
    %1201 = vst [vmem:[#allocation2] sm:$0xff] %v1193
    %1202 = vst.msk [vmem:[#allocation2 + $0x8] sm:$0xff] %vm34, %v1195
    %1203 = vst [vmem:[#allocation2 + $0x10] sm:$0xff] %v1197
    %1204 = vst.msk [vmem:[#allocation2 + $0x18] sm:$0xff] %vm34, %v1199
    // Predicated region
    $region30: #{tpu_custom_call.1} parent=1 // pred_check
      _
    $region31: #{tpu_custom_call.1} parent=1 // pred_check_branch
      %1206 = sbr.rel (0) target = $region33
    $region32: #{tpu_custom_call.1} parent=1 // pred_region
      %s1208 = ssub.s32 512, 512
      %1209 = vsyncadd [#allocation3], %s1208
      %s1210 = sshll.u32 [#allocation2], 4
      %s1211 = int_to_ptr.vmem [resolvable:$true] %s1210
      %1216 = dma.vmem_to_hbm [thread:$0]  %s1211, 512, %s7, [#allocation3], 256, 256, 16
    $region33: #{tpu_custom_call.1} parent=1 // pred_fallthru
      _
    // Predicated region
    $region34: #{tpu_custom_call.1} parent=1 // pred_check
      _
    $region35: #{tpu_custom_call.1} parent=1 // pred_check_branch
      %1218 = sbr.rel (0) target = $region37
    $region36: #{tpu_custom_call.1} parent=1 // pred_region
      %1219 = dma.done [#allocation3], 512
    $region37: #{tpu_custom_call.1} parent=1 // pred_fallthru
      _
    %1220 = vsyncpa [#allocation3], 1

</llo_original>
